<compile_context>
chip_gen: v6e
topology: v6e:2x2x1
jax: 0.10.0
libtpu: 0.0.40
codegen_flags: <defaults>
</compile_context>

<pallas_src>
import functools

import jax
import jax.numpy as jnp
import numpy as np
from jax.experimental import pallas as pl
from jax.experimental.pallas import tpu as pltpu

# Small synthetic sizes consistent with the module.
BATCH = 2          # N
SEQ_LEN = 16       # L
REPR_DIM = 8       # C  (representation_dim)
LATENT_DIM = 32    # K  (latent_dim)
NUM_STEPS = 3


# ---------------------------------------------------------------------------
# Fused kernel: MXU linear + block-diagonal batch packing + power-of-P apply.
# ---------------------------------------------------------------------------
def _fused_predictor_kernel(state_ref, lat_ref, w_ref, b_ref,
                            out_ref, gt_ref, pblk_ref, s_ref, *, num_steps):
    # state_ref: (N, L, C)    VMEM
    # lat_ref:   (N, K)       VMEM
    # w_ref:     (K, C*C)     VMEM  lane-dense linear weight ([in, out] layout)
    # b_ref:     (1, C*C)     VMEM  linear bias
    # out_ref:   (N, Lp, C)   VMEM  next_state
    # gt_ref:    (N, Lp, C)   VMEM  initial_state[:, num_steps:]
    # pblk_ref:  (N*C, N*C)   VMEM scratch: block-diagonal predictor
    # s_ref:     (Lp, N*C)    VMEM scratch: both batches packed along lanes
    n, _, c = state_ref.shape
    lp = out_ref.shape[1]

    # --- Linear (predictor_dictionary) on the MXU: (N,K) @ (K,C*C) + b ---
    pred_flat = jnp.dot(lat_ref[...], w_ref[...],
                        preferred_element_type=jnp.float32) + b_ref[...]

    # --- Build block-diagonal P_blk and the lane-packed state S ---
    pblk_ref[...] = jnp.zeros_like(pblk_ref)
    for bi in range(n):                              # compile-time unroll (N = 2)
        # Relayout batch bi's 64-lane row into its (C, C) diagonal block via
        # C static lane-slices (tiny masked stores; no in-kernel reshape).
        for r in range(c):
            pblk_ref[bi * c + r:bi * c + r + 1, bi * c:(bi + 1) * c] = (
                pred_flat[bi:bi + 1, r * c:(r + 1) * c])
        # Pack this batch's state into lane group bi of S.
        s_ref[:, bi * c:(bi + 1) * c] = state_ref[bi][:lp, :]

    # --- P_eff = P_blk^num_steps, then a single (Lp, N*C) @ P_eff matmul ---
    p_blk = pblk_ref[...]
    p_eff = p_blk
    for _ in range(num_steps - 1):                   # num_steps is a Python int
        p_eff = jnp.dot(p_eff, p_blk, preferred_element_type=jnp.float32)
    result = jnp.dot(s_ref[...], p_eff, preferred_element_type=jnp.float32)

    # --- Split lane groups back out + write the ground-truth slice ---
    for bi in range(n):
        out_ref[bi, :, :] = result[:, bi * c:(bi + 1) * c].astype(out_ref.dtype)
        gt_ref[bi, :, :] = state_ref[bi][num_steps:, :]


def predictor_forward(initial_state, latent_variable, w, b, num_steps):
    n, l, c = initial_state.shape

    # Degenerate step counts: follow torch slicing semantics, no kernel launch.
    if num_steps <= 0:
        # torch: initial_state[:, :-0] is empty; initial_state[:, 0:] is full.
        return initial_state[:, :0], initial_state
    if num_steps >= l:
        return initial_state[:, :0], initial_state[:, num_steps:]

    lp = l - num_steps
    b2 = b.reshape(1, c * c)                 # free wrapper-side glue (broadcast row)

    next_state, next_state_ground_true = pl.pallas_call(
        functools.partial(_fused_predictor_kernel, num_steps=num_steps),
        out_shape=(
            jax.ShapeDtypeStruct((n, lp, c), initial_state.dtype),   # next_state
            jax.ShapeDtypeStruct((n, lp, c), initial_state.dtype),   # ground truth
        ),
        in_specs=[
            pl.BlockSpec(memory_space=pltpu.MemorySpace.VMEM),   # initial_state
            pl.BlockSpec(memory_space=pltpu.MemorySpace.VMEM),   # latent_variable
            pl.BlockSpec(memory_space=pltpu.MemorySpace.VMEM),   # W (K, C*C)
            pl.BlockSpec(memory_space=pltpu.MemorySpace.VMEM),   # b (1, C*C)
        ],
        out_specs=(
            pl.BlockSpec(memory_space=pltpu.MemorySpace.VMEM),
            pl.BlockSpec(memory_space=pltpu.MemorySpace.VMEM),
        ),
        scratch_shapes=[
            pltpu.VMEM((n * c, n * c), jnp.float32),   # P_blk (block diagonal)
            pltpu.VMEM((lp, n * c), jnp.float32),      # packed state S
        ],
    )(initial_state, latent_variable, w, b2)

    return next_state, next_state_ground_true


def predictor_reference(initial_state, latent_variable, w, b, num_steps):
    n, l, c = initial_state.shape
    pred = (latent_variable @ w + b).reshape(n, c, c)
    state = initial_state[:, :l - num_steps] if num_steps > 0 else initial_state[:, :0]
    for _ in range(num_steps):
        state = jnp.einsum("nlc,ncb->nlb", state, pred)
    return state, initial_state[:, num_steps:]


if __name__ == "__main__":
    key = jax.random.PRNGKey(0)
    k1, k2, k3, k4 = jax.random.split(key, 4)

    initial_state = jax.random.normal(
        k1, (BATCH, SEQ_LEN, REPR_DIM), dtype=jnp.float32)
    latent_variable = jax.random.normal(
        k2, (BATCH, LATENT_DIM), dtype=jnp.float32)

    # Deterministic parameter init (torch nn.Linear-style uniform bounds).
    # W stored as [K, C*C] (transposed vs torch's [out, in]) so pred = lat @ W + b.
    bound = 1.0 / (LATENT_DIM ** 0.5)
    w = jax.random.uniform(
        k3, (LATENT_DIM, REPR_DIM * REPR_DIM), jnp.float32, -bound, bound)
    b = jax.random.uniform(
        k4, (REPR_DIM * REPR_DIM,), jnp.float32, -bound, bound)

    next_state, gt = predictor_forward(
        initial_state, latent_variable, w, b, NUM_STEPS)
    jax.block_until_ready((next_state, gt))

    # Check against a pure-JAX reference (sequential ((S.P).P).P loop).
    ref_next, ref_gt = predictor_reference(
        initial_state, latent_variable, w, b, NUM_STEPS)
    assert next_state.shape == (BATCH, SEQ_LEN - NUM_STEPS, REPR_DIM)
    assert gt.shape == (BATCH, SEQ_LEN - NUM_STEPS, REPR_DIM)
    np.testing.assert_allclose(
        np.asarray(next_state), np.asarray(ref_next), rtol=1e-4, atol=1e-5)
    np.testing.assert_allclose(np.asarray(gt), np.asarray(ref_gt))

    print("KERNEL_OK")
</pallas_src>

<mosaic_0001>
module attributes {stable_mosaic.version = 11 : i64} {
  func.func @_fused_predictor_kernel(%arg0: memref<2x16x8xf32, #tpu.memory_space<vmem>>, %arg1: memref<2x32xf32, #tpu.memory_space<vmem>>, %arg2: memref<32x64xf32, #tpu.memory_space<vmem>>, %arg3: memref<1x64xf32, #tpu.memory_space<vmem>>, %arg4: memref<2x13x8xf32, #tpu.memory_space<vmem>>, %arg5: memref<2x13x8xf32, #tpu.memory_space<vmem>>, %arg6: memref<16x16xf32, #tpu.memory_space<vmem>>, %arg7: memref<13x16xf32, #tpu.memory_space<vmem>>) attributes {dimension_semantics = [], scalar_prefetch = 0 : i64, scratch_operands = 2 : i64, tpu.core_type = #tpu.core_type<tc>} {
    %c0 = arith.constant 0 : index
    %c0_0 = arith.constant 0 : index
    %0 = vector.load %arg1[%c0, %c0_0] : memref<2x32xf32, #tpu.memory_space<vmem>>, vector<2x32xf32>
    %c0_1 = arith.constant 0 : index
    %c0_2 = arith.constant 0 : index
    %1 = vector.load %arg2[%c0_1, %c0_2] : memref<32x64xf32, #tpu.memory_space<vmem>>, vector<32x64xf32>
    %cst = arith.constant dense<0.000000e+00> : vector<2x64xf32>
    %2 = tpu.matmul %0, %1, %cst {dimension_numbers = #tpu.dot_dimension_numbers<[1], [0], [0], [1], [0, 0, 1, 1], [], []>} : vector<2x32xf32>, vector<32x64xf32>, vector<2x64xf32> -> vector<2x64xf32>
    %c0_3 = arith.constant 0 : index
    %c0_4 = arith.constant 0 : index
    %3 = vector.load %arg3[%c0_3, %c0_4] : memref<1x64xf32, #tpu.memory_space<vmem>>, vector<1x64xf32>
    %4 = vector.broadcast %3 : vector<1x64xf32> to vector<2x64xf32>
    %5 = arith.addf %2, %4 : vector<2x64xf32>
    %cst_5 = arith.constant 0.000000e+00 : f32
    %6 = vector.broadcast %cst_5 : f32 to vector<16x16xf32>
    %c0_6 = arith.constant 0 : index
    %c0_7 = arith.constant 0 : index
    %7 = vector.load %arg6[%c0_6, %c0_7] : memref<16x16xf32, #tpu.memory_space<vmem>>, vector<16x16xf32>
    tpu.vector_store %arg6[%c0_6, %c0_7], %6 {strides = array<i32>} : memref<16x16xf32, #tpu.memory_space<vmem>>, vector<16x16xf32>,
    %8 = vector.extract_strided_slice %5 {offsets = [0, 0], sizes = [1, 8], strides = [1, 1]} : vector<2x64xf32> to vector<1x8xf32>
    %c0_8 = arith.constant 0 : index
    %c0_9 = arith.constant 0 : index
    %9 = vector.load %arg6[%c0_8, %c0_9] : memref<16x16xf32, #tpu.memory_space<vmem>>, vector<1x8xf32>
    tpu.vector_store %arg6[%c0_8, %c0_9], %8 {strides = array<i32>} : memref<16x16xf32, #tpu.memory_space<vmem>>, vector<1x8xf32>,
    %10 = vector.extract_strided_slice %5 {offsets = [0, 8], sizes = [1, 8], strides = [1, 1]} : vector<2x64xf32> to vector<1x8xf32>
    %c1 = arith.constant 1 : index
    %c0_10 = arith.constant 0 : index
    %11 = vector.load %arg6[%c1, %c0_10] : memref<16x16xf32, #tpu.memory_space<vmem>>, vector<1x8xf32>
    tpu.vector_store %arg6[%c1, %c0_10], %10 {strides = array<i32>} : memref<16x16xf32, #tpu.memory_space<vmem>>, vector<1x8xf32>,
    %12 = vector.extract_strided_slice %5 {offsets = [0, 16], sizes = [1, 8], strides = [1, 1]} : vector<2x64xf32> to vector<1x8xf32>
    %c2 = arith.constant 2 : index
    %c0_11 = arith.constant 0 : index
    %13 = vector.load %arg6[%c2, %c0_11] : memref<16x16xf32, #tpu.memory_space<vmem>>, vector<1x8xf32>
    tpu.vector_store %arg6[%c2, %c0_11], %12 {strides = array<i32>} : memref<16x16xf32, #tpu.memory_space<vmem>>, vector<1x8xf32>,
    %14 = vector.extract_strided_slice %5 {offsets = [0, 24], sizes = [1, 8], strides = [1, 1]} : vector<2x64xf32> to vector<1x8xf32>
    %c3 = arith.constant 3 : index
    %c0_12 = arith.constant 0 : index
    %15 = vector.load %arg6[%c3, %c0_12] : memref<16x16xf32, #tpu.memory_space<vmem>>, vector<1x8xf32>
    tpu.vector_store %arg6[%c3, %c0_12], %14 {strides = array<i32>} : memref<16x16xf32, #tpu.memory_space<vmem>>, vector<1x8xf32>,
    %16 = vector.extract_strided_slice %5 {offsets = [0, 32], sizes = [1, 8], strides = [1, 1]} : vector<2x64xf32> to vector<1x8xf32>
    %c4 = arith.constant 4 : index
    %c0_13 = arith.constant 0 : index
    %17 = vector.load %arg6[%c4, %c0_13] : memref<16x16xf32, #tpu.memory_space<vmem>>, vector<1x8xf32>
    tpu.vector_store %arg6[%c4, %c0_13], %16 {strides = array<i32>} : memref<16x16xf32, #tpu.memory_space<vmem>>, vector<1x8xf32>,
    %18 = vector.extract_strided_slice %5 {offsets = [0, 40], sizes = [1, 8], strides = [1, 1]} : vector<2x64xf32> to vector<1x8xf32>
    %c5 = arith.constant 5 : index
    %c0_14 = arith.constant 0 : index
    %19 = vector.load %arg6[%c5, %c0_14] : memref<16x16xf32, #tpu.memory_space<vmem>>, vector<1x8xf32>
    tpu.vector_store %arg6[%c5, %c0_14], %18 {strides = array<i32>} : memref<16x16xf32, #tpu.memory_space<vmem>>, vector<1x8xf32>,
    %20 = vector.extract_strided_slice %5 {offsets = [0, 48], sizes = [1, 8], strides = [1, 1]} : vector<2x64xf32> to vector<1x8xf32>
    %c6 = arith.constant 6 : index
    %c0_15 = arith.constant 0 : index
    %21 = vector.load %arg6[%c6, %c0_15] : memref<16x16xf32, #tpu.memory_space<vmem>>, vector<1x8xf32>
    tpu.vector_store %arg6[%c6, %c0_15], %20 {strides = array<i32>} : memref<16x16xf32, #tpu.memory_space<vmem>>, vector<1x8xf32>,
    %22 = vector.extract_strided_slice %5 {offsets = [0, 56], sizes = [1, 8], strides = [1, 1]} : vector<2x64xf32> to vector<1x8xf32>
    %c7 = arith.constant 7 : index
    %c0_16 = arith.constant 0 : index
    %23 = vector.load %arg6[%c7, %c0_16] : memref<16x16xf32, #tpu.memory_space<vmem>>, vector<1x8xf32>
    tpu.vector_store %arg6[%c7, %c0_16], %22 {strides = array<i32>} : memref<16x16xf32, #tpu.memory_space<vmem>>, vector<1x8xf32>,
    %c0_17 = arith.constant 0 : index
    %c0_18 = arith.constant 0 : index
    %c0_19 = arith.constant 0 : index
    %24 = vector.load %arg0[%c0_17, %c0_18, %c0_19] : memref<2x16x8xf32, #tpu.memory_space<vmem>>, vector<1x16x8xf32>
    %25 = vector.shape_cast %24 : vector<1x16x8xf32> to vector<16x8xf32>
    %26 = vector.extract_strided_slice %25 {offsets = [0, 0], sizes = [13, 8], strides = [1, 1]} : vector<16x8xf32> to vector<13x8xf32>
    %c0_20 = arith.constant 0 : index
    %c0_21 = arith.constant 0 : index
    %27 = vector.load %arg7[%c0_20, %c0_21] : memref<13x16xf32, #tpu.memory_space<vmem>>, vector<13x8xf32>
    tpu.vector_store %arg7[%c0_20, %c0_21], %26 {strides = array<i32>} : memref<13x16xf32, #tpu.memory_space<vmem>>, vector<13x8xf32>,
    %28 = vector.extract_strided_slice %5 {offsets = [1, 0], sizes = [1, 8], strides = [1, 1]} : vector<2x64xf32> to vector<1x8xf32>
    %c8 = arith.constant 8 : index
    %c8_22 = arith.constant 8 : index
    %29 = vector.load %arg6[%c8, %c8_22] : memref<16x16xf32, #tpu.memory_space<vmem>>, vector<1x8xf32>
    tpu.vector_store %arg6[%c8, %c8_22], %28 {strides = array<i32>} : memref<16x16xf32, #tpu.memory_space<vmem>>, vector<1x8xf32>,
    %30 = vector.extract_strided_slice %5 {offsets = [1, 8], sizes = [1, 8], strides = [1, 1]} : vector<2x64xf32> to vector<1x8xf32>
    %c9 = arith.constant 9 : index
    %c8_23 = arith.constant 8 : index
    %31 = vector.load %arg6[%c9, %c8_23] : memref<16x16xf32, #tpu.memory_space<vmem>>, vector<1x8xf32>
    tpu.vector_store %arg6[%c9, %c8_23], %30 {strides = array<i32>} : memref<16x16xf32, #tpu.memory_space<vmem>>, vector<1x8xf32>,
    %32 = vector.extract_strided_slice %5 {offsets = [1, 16], sizes = [1, 8], strides = [1, 1]} : vector<2x64xf32> to vector<1x8xf32>
    %c10 = arith.constant 10 : index
    %c8_24 = arith.constant 8 : index
    %33 = vector.load %arg6[%c10, %c8_24] : memref<16x16xf32, #tpu.memory_space<vmem>>, vector<1x8xf32>
    tpu.vector_store %arg6[%c10, %c8_24], %32 {strides = array<i32>} : memref<16x16xf32, #tpu.memory_space<vmem>>, vector<1x8xf32>,
    %34 = vector.extract_strided_slice %5 {offsets = [1, 24], sizes = [1, 8], strides = [1, 1]} : vector<2x64xf32> to vector<1x8xf32>
    %c11 = arith.constant 11 : index
    %c8_25 = arith.constant 8 : index
    %35 = vector.load %arg6[%c11, %c8_25] : memref<16x16xf32, #tpu.memory_space<vmem>>, vector<1x8xf32>
    tpu.vector_store %arg6[%c11, %c8_25], %34 {strides = array<i32>} : memref<16x16xf32, #tpu.memory_space<vmem>>, vector<1x8xf32>,
    %36 = vector.extract_strided_slice %5 {offsets = [1, 32], sizes = [1, 8], strides = [1, 1]} : vector<2x64xf32> to vector<1x8xf32>
    %c12 = arith.constant 12 : index
    %c8_26 = arith.constant 8 : index
    %37 = vector.load %arg6[%c12, %c8_26] : memref<16x16xf32, #tpu.memory_space<vmem>>, vector<1x8xf32>
    tpu.vector_store %arg6[%c12, %c8_26], %36 {strides = array<i32>} : memref<16x16xf32, #tpu.memory_space<vmem>>, vector<1x8xf32>,
    %38 = vector.extract_strided_slice %5 {offsets = [1, 40], sizes = [1, 8], strides = [1, 1]} : vector<2x64xf32> to vector<1x8xf32>
    %c13 = arith.constant 13 : index
    %c8_27 = arith.constant 8 : index
    %39 = vector.load %arg6[%c13, %c8_27] : memref<16x16xf32, #tpu.memory_space<vmem>>, vector<1x8xf32>
    tpu.vector_store %arg6[%c13, %c8_27], %38 {strides = array<i32>} : memref<16x16xf32, #tpu.memory_space<vmem>>, vector<1x8xf32>,
    %40 = vector.extract_strided_slice %5 {offsets = [1, 48], sizes = [1, 8], strides = [1, 1]} : vector<2x64xf32> to vector<1x8xf32>
    %c14 = arith.constant 14 : index
    %c8_28 = arith.constant 8 : index
    %41 = vector.load %arg6[%c14, %c8_28] : memref<16x16xf32, #tpu.memory_space<vmem>>, vector<1x8xf32>
    tpu.vector_store %arg6[%c14, %c8_28], %40 {strides = array<i32>} : memref<16x16xf32, #tpu.memory_space<vmem>>, vector<1x8xf32>,
    %42 = vector.extract_strided_slice %5 {offsets = [1, 56], sizes = [1, 8], strides = [1, 1]} : vector<2x64xf32> to vector<1x8xf32>
    %c15 = arith.constant 15 : index
    %c8_29 = arith.constant 8 : index
    %43 = vector.load %arg6[%c15, %c8_29] : memref<16x16xf32, #tpu.memory_space<vmem>>, vector<1x8xf32>
    tpu.vector_store %arg6[%c15, %c8_29], %42 {strides = array<i32>} : memref<16x16xf32, #tpu.memory_space<vmem>>, vector<1x8xf32>,
    %c1_30 = arith.constant 1 : index
    %c0_31 = arith.constant 0 : index
    %c0_32 = arith.constant 0 : index
    %44 = vector.load %arg0[%c1_30, %c0_31, %c0_32] : memref<2x16x8xf32, #tpu.memory_space<vmem>>, vector<1x16x8xf32>
    %45 = vector.shape_cast %44 : vector<1x16x8xf32> to vector<16x8xf32>
    %46 = vector.extract_strided_slice %45 {offsets = [0, 0], sizes = [13, 8], strides = [1, 1]} : vector<16x8xf32> to vector<13x8xf32>
    %c0_33 = arith.constant 0 : index
    %c8_34 = arith.constant 8 : index
    %47 = vector.load %arg7[%c0_33, %c8_34] : memref<13x16xf32, #tpu.memory_space<vmem>>, vector<13x8xf32>
    tpu.vector_store %arg7[%c0_33, %c8_34], %46 {strides = array<i32>} : memref<13x16xf32, #tpu.memory_space<vmem>>, vector<13x8xf32>,
    %c0_35 = arith.constant 0 : index
    %c0_36 = arith.constant 0 : index
    %48 = vector.load %arg6[%c0_35, %c0_36] : memref<16x16xf32, #tpu.memory_space<vmem>>, vector<16x16xf32>
    %cst_37 = arith.constant dense<0.000000e+00> : vector<16x16xf32>
    %49 = tpu.matmul %48, %48, %cst_37 {dimension_numbers = #tpu.dot_dimension_numbers<[1], [0], [0], [1], [0, 0, 1, 1], [], []>} : vector<16x16xf32>, vector<16x16xf32>, vector<16x16xf32> -> vector<16x16xf32>
    %cst_38 = arith.constant dense<0.000000e+00> : vector<16x16xf32>
    %50 = tpu.matmul %49, %48, %cst_38 {dimension_numbers = #tpu.dot_dimension_numbers<[1], [0], [0], [1], [0, 0, 1, 1], [], []>} : vector<16x16xf32>, vector<16x16xf32>, vector<16x16xf32> -> vector<16x16xf32>
    %c0_39 = arith.constant 0 : index
    %c0_40 = arith.constant 0 : index
    %51 = vector.load %arg7[%c0_39, %c0_40] : memref<13x16xf32, #tpu.memory_space<vmem>>, vector<13x16xf32>
    %cst_41 = arith.constant dense<0.000000e+00> : vector<13x16xf32>
    %52 = tpu.matmul %51, %50, %cst_41 {dimension_numbers = #tpu.dot_dimension_numbers<[1], [0], [0], [1], [0, 0, 1, 1], [], []>} : vector<13x16xf32>, vector<16x16xf32>, vector<13x16xf32> -> vector<13x16xf32>
    %53 = vector.extract_strided_slice %52 {offsets = [0, 0], sizes = [13, 8], strides = [1, 1]} : vector<13x16xf32> to vector<13x8xf32>
    %c0_42 = arith.constant 0 : index
    %c0_43 = arith.constant 0 : index
    %c0_44 = arith.constant 0 : index
    %54 = vector.load %arg4[%c0_42, %c0_43, %c0_44] : memref<2x13x8xf32, #tpu.memory_space<vmem>>, vector<1x13x8xf32>
    %55 = vector.shape_cast %54 : vector<1x13x8xf32> to vector<13x8xf32>
    %56 = vector.shape_cast %53 : vector<13x8xf32> to vector<1x13x8xf32>
    tpu.vector_store %arg4[%c0_42, %c0_43, %c0_44], %56 {strides = array<i32>} : memref<2x13x8xf32, #tpu.memory_space<vmem>>, vector<1x13x8xf32>,
    %c0_45 = arith.constant 0 : index
    %c0_46 = arith.constant 0 : index
    %c0_47 = arith.constant 0 : index
    %57 = vector.load %arg0[%c0_45, %c0_46, %c0_47] : memref<2x16x8xf32, #tpu.memory_space<vmem>>, vector<1x16x8xf32>
    %58 = vector.shape_cast %57 : vector<1x16x8xf32> to vector<16x8xf32>
    %59 = vector.extract_strided_slice %58 {offsets = [3, 0], sizes = [13, 8], strides = [1, 1]} : vector<16x8xf32> to vector<13x8xf32>
    %c0_48 = arith.constant 0 : index
    %c0_49 = arith.constant 0 : index
    %c0_50 = arith.constant 0 : index
    %60 = vector.load %arg5[%c0_48, %c0_49, %c0_50] : memref<2x13x8xf32, #tpu.memory_space<vmem>>, vector<1x13x8xf32>
    %61 = vector.shape_cast %60 : vector<1x13x8xf32> to vector<13x8xf32>
    %62 = vector.shape_cast %59 : vector<13x8xf32> to vector<1x13x8xf32>
    tpu.vector_store %arg5[%c0_48, %c0_49, %c0_50], %62 {strides = array<i32>} : memref<2x13x8xf32, #tpu.memory_space<vmem>>, vector<1x13x8xf32>,
    %63 = vector.extract_strided_slice %52 {offsets = [0, 8], sizes = [13, 8], strides = [1, 1]} : vector<13x16xf32> to vector<13x8xf32>
    %c1_51 = arith.constant 1 : index
    %c0_52 = arith.constant 0 : index
    %c0_53 = arith.constant 0 : index
    %64 = vector.load %arg4[%c1_51, %c0_52, %c0_53] : memref<2x13x8xf32, #tpu.memory_space<vmem>>, vector<1x13x8xf32>
    %65 = vector.shape_cast %64 : vector<1x13x8xf32> to vector<13x8xf32>
    %66 = vector.shape_cast %63 : vector<13x8xf32> to vector<1x13x8xf32>
    tpu.vector_store %arg4[%c1_51, %c0_52, %c0_53], %66 {strides = array<i32>} : memref<2x13x8xf32, #tpu.memory_space<vmem>>, vector<1x13x8xf32>,
    %c1_54 = arith.constant 1 : index
    %c0_55 = arith.constant 0 : index
    %c0_56 = arith.constant 0 : index
    %67 = vector.load %arg0[%c1_54, %c0_55, %c0_56] : memref<2x16x8xf32, #tpu.memory_space<vmem>>, vector<1x16x8xf32>
    %68 = vector.shape_cast %67 : vector<1x16x8xf32> to vector<16x8xf32>
    %69 = vector.extract_strided_slice %68 {offsets = [3, 0], sizes = [13, 8], strides = [1, 1]} : vector<16x8xf32> to vector<13x8xf32>
    %c1_57 = arith.constant 1 : index
    %c0_58 = arith.constant 0 : index
    %c0_59 = arith.constant 0 : index
    %70 = vector.load %arg5[%c1_57, %c0_58, %c0_59] : memref<2x13x8xf32, #tpu.memory_space<vmem>>, vector<1x13x8xf32>
    %71 = vector.shape_cast %70 : vector<1x13x8xf32> to vector<13x8xf32>
    %72 = vector.shape_cast %69 : vector<13x8xf32> to vector<1x13x8xf32>
    tpu.vector_store %arg5[%c1_57, %c0_58, %c0_59], %72 {strides = array<i32>} : memref<2x13x8xf32, #tpu.memory_space<vmem>>, vector<1x13x8xf32>,
    return
  }
}

</mosaic_0001>

<llo_original>
// kernel: tpu_custom_call.1
$region0: #{tpu_custom_call.1}
  #allocation0 [shape = 'u32[]', space=smem, size = 0x4, offset = 0x4, fixed_abs, tag = 'smem constant byte address 0x4 - core index']
  #allocation1 [shape = 'u32[144,128]{1,0:T(1,128)}', space=vmem, size = 0x12000, scoped, tag = 'internal scratch']
  #allocation2 [shape = 'f32[16,16]{1,0:T(8,128)}', space=vmem, size = 0x2000, scoped, tag = 'scratch operand']
  #allocation3 [shape = 'f32[13,16]{1,0:T(8,128)}', space=vmem, size = 0x2000, scoped, tag = 'scratch operand']
  %s0 = inlined_call_operand.vmem [shape: f32[2,16,8], index: 0, kind: input, shape index: {}]
  %s1 = inlined_call_operand.vmem [shape: f32[2,32], index: 1, kind: input, shape index: {}]
  %s2 = inlined_call_operand.vmem [shape: f32[32,64], index: 2, kind: input, shape index: {}]
  %s3 = inlined_call_operand.vmem [shape: f32[1,64], index: 3, kind: input, shape index: {}]
  %s4 = inlined_call_operand.vmem [shape: f32[2,13,8], index: 4, kind: output, shape index: {0}]
  %s5 = inlined_call_operand.vmem [shape: f32[2,13,8], index: 5, kind: output, shape index: {1}]
  %6 = xla_tuple %s4, %s5
  %s7 = sld [smem:[#allocation0]]
  $region34: #{tpu_custom_call.1} parent=0
    _
  %s9 = ssub.s32 1, %s7
  %s10 = scalar_select 0, %s9, %s7
  // Predicated region
  $region2: #{tpu_custom_call.1} parent=0 // pred_check
    _
  $region3: #{tpu_custom_call.1} parent=0 // pred_check_branch
    %12 = sbr.rel (0) target = $region5
  $region4: #{tpu_custom_call.1} parent=0 // pred_region
    _
  $region5: #{tpu_custom_call.1} parent=0 // pred_fallthru
    _
  // Predicated region
  $region6: #{tpu_custom_call.1} parent=0 // pred_check
    _
  $region7: #{tpu_custom_call.1} parent=0 // pred_check_branch
    %14 = sbr.rel (0) target = $region9
  $region8: #{tpu_custom_call.1} parent=0 // pred_region
    _
  $region9: #{tpu_custom_call.1} parent=0 // pred_fallthru
    _
  // Predicated region
  $region10: #{tpu_custom_call.1} parent=0 // pred_check
    _
  $region11: #{tpu_custom_call.1} parent=0 // pred_check_branch
    %16 = sbr.rel (0) target = $region13
  $region12: #{tpu_custom_call.1} parent=0 // pred_region
    _
  $region13: #{tpu_custom_call.1} parent=0 // pred_fallthru
    _
  // Predicated region
  $region14: #{tpu_custom_call.1} parent=0 // pred_check
    _
  $region15: #{tpu_custom_call.1} parent=0 // pred_check_branch
    %18 = sbr.rel (0) target = $region17
  $region16: #{tpu_custom_call.1} parent=0 // pred_region
    _
  $region17: #{tpu_custom_call.1} parent=0 // pred_fallthru
    _
  %v19 = vld [vmem:[%s1] sm:$0x3]
  %v20 = vld [vmem:[%s2] sm:$0xff]
  %v21 = vld [vmem:[%s2 + $0x8] sm:$0xff]
  %v22 = vld [vmem:[%s2 + $0x10] sm:$0xff]
  %v23 = vld [vmem:[%s2 + $0x18] sm:$0xff]
  %v24 = vld [vmem:[%s3] sm:$0x1]
  %v26 = vlaneseq
  %v27 = vshrl.u32 %v26, 7
  %v28 = vsub.s32 0, %v27
  %v29 = vrot.slane %v24, %v28
  %vm31 = vcmask 261120
  %v33 = vsel %vm31, %v19, 0
  %35 = vmatprep.subr.mxu0 0.0
  %36 = vmatpush1.msra.mxu0 0.0
  %37 = vmatprep.subr.mxu0 0.0
  %38 = vmatpush1.msra.mxu0 0.0
  %39 = vmatprep.subr.mxu0 0.0
  %40 = vmatpush1.msra.mxu0 0.0
  %41 = vmatprep.subr.mxu0 0.0
  %42 = vmatpush1.msra.mxu0 0.0
  %43 = vmatprep.subr.mxu0 0.0
  %44 = vmatpush1.msra.mxu0 0.0
  %45 = vmatprep.subr.mxu0 0.0
  %46 = vmatpush1.msra.mxu0 0.0
  %47 = vmatprep.subr.mxu0 0.0
  %48 = vmatpush1.msra.mxu0 0.0
  %49 = vmatprep.subr.mxu0 0.0
  %50 = vmatpush1.msra.mxu0 0.0
  %51 = vmatprep.subr.mxu0 0.0
  %52 = vmatpush1.msra.mxu0 0.0
  %53 = vmatprep.subr.mxu0 0.0
  %54 = vmatpush1.msra.mxu0 0.0
  %55 = vmatprep.subr.mxu0 0.0
  %56 = vmatpush1.msra.mxu0 0.0
  %57 = vmatprep.subr.mxu0 0.0
  %58 = vmatpush1.msra.mxu0 0.0
  %59 = vmatprep.subr.mxu0 0.0
  %60 = vmatpush1.msra.mxu0 %v23
  %61 = vmatprep.subr.mxu0 0.0
  %62 = vmatpush1.msra.mxu0 %v22
  %63 = vmatprep.subr.mxu0 0.0
  %64 = vmatpush1.msra.mxu0 %v21
  %65 = vmatprep.subr.mxu0 0.0
  %66 = vmatpush1.msra.mxu0 %v20
  %67 = vmatprep.subr.mxu0 0.0
  %68 = vmatpush2.msra.mxu0 0.0
  %69 = vmatprep.subr.mxu0 0.0
  %70 = vmatpush2.msra.mxu0 0.0
  %71 = vmatprep.subr.mxu0 0.0
  %72 = vmatpush2.msra.mxu0 0.0
  %73 = vmatprep.subr.mxu0 0.0
  %74 = vmatpush2.msra.mxu0 0.0
  %75 = vmatprep.subr.mxu0 0.0
  %76 = vmatpush2.msra.mxu0 0.0
  %77 = vmatprep.subr.mxu0 0.0
  %78 = vmatpush2.msra.mxu0 0.0
  %79 = vmatprep.subr.mxu0 0.0
  %80 = vmatpush2.msra.mxu0 0.0
  %81 = vmatprep.subr.mxu0 0.0
  %82 = vmatpush2.msra.mxu0 0.0
  %83 = vmatprep.subr.mxu0 0.0
  %84 = vmatpush2.msra.mxu0 0.0
  %85 = vmatprep.subr.mxu0 0.0
  %86 = vmatpush2.msra.mxu0 0.0
  %87 = vmatprep.subr.mxu0 0.0
  %88 = vmatpush2.msra.mxu0 0.0
  %89 = vmatprep.subr.mxu0 0.0
  %90 = vmatpush2.msra.mxu0 0.0
  %91 = vmatprep.subr.mxu0 0.0
  %92 = vmatpush2.msra.mxu0 0.0
  %93 = vmatprep.subr.mxu0 0.0
  %94 = vmatpush2.msra.mxu0 0.0
  %95 = vmatprep.subr.mxu0 0.0
  %96 = vmatpush2.msra.mxu0 0.0
  %97 = vmatprep.subr.mxu0 0.0
  %98 = vmatpush2.msra.mxu0 0.0
  %99 = vmatprep.mubr.f32.mxu0 0.0
  %100 = vmatmul.mubr.f32.gmra.mxu0 %v33
  %v101 = vpop.f32.mrf.mxu0
  %v102 = vadd.f32 %v29, %v101
  %v103 = vpop.f32.mrf.mxu0
  %104 = vdwg.mxu0
  %vm105 = vcmask 130048
  %106 = vst.msk [vmem:[#allocation2] sm:$0xff] %vm105, 0.0
  %107 = vst.msk [vmem:[#allocation2 + $0x8] sm:$0xff] %vm105, 0.0
  %vm108 = vcmask 57344
  %109 = vst.msk [vmem:[#allocation2] sm:$0x1] %vm108, %v102
  %111 = vrot.lane.b32.xlu0 %v102, 120
  %v112 = vpop.permute.xlu0 %111
  %114 = vst.msk [vmem:[#allocation2 + $0x1] sm:$0x1] %vm108, %v112
  %115 = vrot.lane.b32.xlu0 %v102, 112
  %v116 = vpop.permute.xlu0 %115
  %118 = vst.msk [vmem:[#allocation2 + $0x2] sm:$0x1] %vm108, %v116
  %119 = vrot.lane.b32.xlu0 %v102, 104
  %v120 = vpop.permute.xlu0 %119
  %122 = vst.msk [vmem:[#allocation2 + $0x3] sm:$0x1] %vm108, %v120
  %123 = vrot.lane.b32.xlu0 %v102, 96
  %v124 = vpop.permute.xlu0 %123
  %126 = vst.msk [vmem:[#allocation2 + $0x4] sm:$0x1] %vm108, %v124
  %127 = vrot.lane.b32.xlu0 %v102, 88
  %v128 = vpop.permute.xlu0 %127
  %130 = vst.msk [vmem:[#allocation2 + $0x5] sm:$0x1] %vm108, %v128
  %131 = vrot.lane.b32.xlu0 %v102, 80
  %v132 = vpop.permute.xlu0 %131
  %134 = vst.msk [vmem:[#allocation2 + $0x6] sm:$0x1] %vm108, %v132
  %135 = vrot.lane.b32.xlu0 %v102, 72
  %v136 = vpop.permute.xlu0 %135
  %138 = vst.msk [vmem:[#allocation2 + $0x7] sm:$0x1] %vm108, %v136
  %v139 = vld [vmem:[%s0] sm:$0xff]
  %v140 = vld [vmem:[%s0 + $0x8] sm:$0xff]
  %vm141 = vcmask 64512
  %142 = vst.msk [vmem:[#allocation3] sm:$0xff] %vm141, %v139
  %vm143 = vcmask 61440
  %144 = vst.msk [vmem:[#allocation3 + $0x8] sm:$0x1f] %vm143, %v140
  %145 = vrot.lane.b32.xlu0 %v102, 8
  %v146 = vpop.permute.xlu0 %145
  %vm148 = vcmask 123969
  %149 = vst.msk [vmem:[#allocation2 + $0x7] sm:$0x2] %vm148, %v146
  %150 = vst.msk [vmem:[#allocation2 + $0x8] sm:$0x2] %vm148, %v102
  %151 = vst.msk [vmem:[#allocation2 + $0x9] sm:$0x2] %vm148, %v112
  %152 = vst.msk [vmem:[#allocation2 + $0xa] sm:$0x2] %vm148, %v116
  %153 = vst.msk [vmem:[#allocation2 + $0xb] sm:$0x2] %vm148, %v120
  %154 = vst.msk [vmem:[#allocation2 + $0xc] sm:$0x2] %vm148, %v124
  %155 = vst.msk [vmem:[#allocation2 + $0xd] sm:$0x2] %vm148, %v128
  %156 = vst.msk [vmem:[#allocation2 + $0xe] sm:$0x2] %vm148, %v132
  %s157 = scalar_lea.vmem %s0, 16
  %v158 = vld [vmem:[%s157] sm:$0xff]
  %v159 = vld [vmem:[%s157 + $0x8] sm:$0xff]
  %162 = vrot.lane.b32.xlu0 %v158, 8
  %v163 = vpop.permute.xlu0 %162
  %164 = vrot.lane.b32.xlu0 %v159, 8
  %v165 = vpop.permute.xlu0 %164
  %vm168 = vcmask 130112
  %169 = vst.msk [vmem:[#allocation3] sm:$0xff] %vm168, %v163
  %vm170 = vcmask 127040
  %171 = vst.msk [vmem:[#allocation3 + $0x8] sm:$0x1f] %vm170, %v165
  %v172 = vld [vmem:[#allocation2] sm:$0xff]
  %v173 = vld [vmem:[#allocation2 + $0x8] sm:$0xff]
  %v175 = vsel %vm105, %v172, 0
  %v178 = vsel %vm105, %v173, 0
  %180 = vmatprep.subr.mxu0 0.0
  %181 = vmatpush1.msra.mxu0 0.0
  %182 = vmatprep.subr.mxu0 0.0
  %183 = vmatpush1.msra.mxu0 0.0
  %184 = vmatprep.subr.mxu0 0.0
  %185 = vmatpush1.msra.mxu0 0.0
  %186 = vmatprep.subr.mxu0 0.0
  %187 = vmatpush1.msra.mxu0 0.0
  %188 = vmatprep.subr.mxu0 0.0
  %189 = vmatpush1.msra.mxu0 0.0
  %190 = vmatprep.subr.mxu0 0.0
  %191 = vmatpush1.msra.mxu0 0.0
  %192 = vmatprep.subr.mxu0 0.0
  %193 = vmatpush1.msra.mxu0 0.0
  %194 = vmatprep.subr.mxu0 0.0
  %195 = vmatpush1.msra.mxu0 0.0
  %196 = vmatprep.subr.mxu0 0.0
  %197 = vmatpush1.msra.mxu0 0.0
  %198 = vmatprep.subr.mxu0 0.0
  %199 = vmatpush1.msra.mxu0 0.0
  %200 = vmatprep.subr.mxu0 0.0
  %201 = vmatpush1.msra.mxu0 0.0
  %202 = vmatprep.subr.mxu0 0.0
  %203 = vmatpush1.msra.mxu0 0.0
  %204 = vmatprep.subr.mxu0 0.0
  %205 = vmatpush1.msra.mxu0 0.0
  %206 = vmatprep.subr.mxu0 0.0
  %207 = vmatpush1.msra.mxu0 0.0
  %208 = vmatprep.subr.mxu0 0.0
  %209 = vmatpush1.msra.mxu0 %v173
  %210 = vmatprep.subr.mxu0 0.0
  %211 = vmatpush1.msra.mxu0 %v172
  %212 = vmatprep.subr.mxu0 0.0
  %213 = vmatpush2.msra.mxu0 0.0
  %214 = vmatprep.subr.mxu0 0.0
  %215 = vmatpush2.msra.mxu0 0.0
  %216 = vmatprep.subr.mxu0 0.0
  %217 = vmatpush2.msra.mxu0 0.0
  %218 = vmatprep.subr.mxu0 0.0
  %219 = vmatpush2.msra.mxu0 0.0
  %220 = vmatprep.subr.mxu0 0.0
  %221 = vmatpush2.msra.mxu0 0.0
  %222 = vmatprep.subr.mxu0 0.0
  %223 = vmatpush2.msra.mxu0 0.0
  %224 = vmatprep.subr.mxu0 0.0
  %225 = vmatpush2.msra.mxu0 0.0
  %226 = vmatprep.subr.mxu0 0.0
  %227 = vmatpush2.msra.mxu0 0.0
  %228 = vmatprep.subr.mxu0 0.0
  %229 = vmatpush2.msra.mxu0 0.0
  %230 = vmatprep.subr.mxu0 0.0
  %231 = vmatpush2.msra.mxu0 0.0
  %232 = vmatprep.subr.mxu0 0.0
  %233 = vmatpush2.msra.mxu0 0.0
  %234 = vmatprep.subr.mxu0 0.0
  %235 = vmatpush2.msra.mxu0 0.0
  %236 = vmatprep.subr.mxu0 0.0
  %237 = vmatpush2.msra.mxu0 0.0
  %238 = vmatprep.subr.mxu0 0.0
  %239 = vmatpush2.msra.mxu0 0.0
  %240 = vmatprep.subr.mxu0 0.0
  %241 = vmatpush2.msra.mxu0 0.0
  %242 = vmatprep.subr.mxu0 0.0
  %243 = vmatpush2.msra.mxu0 0.0
  %244 = vmatprep.mubr.f32.mxu0 0.0
  %245 = vmatmul.mubr.f32.gmra.mxu0 %v175
  %v246 = vpop.f32.mrf.mxu0
  %v247 = vadd.f32 0.0, %v246
  %v248 = vpop.f32.mrf.mxu0
  %249 = vmatprep.mubr.f32.mxu0 0.0
  %250 = vmatmul.mubr.f32.gmra.mxu0 %v178
  %v251 = vpop.f32.mrf.mxu0
  %v252 = vadd.f32 0.0, %v251
  %v253 = vpop.f32.mrf.mxu0
  %254 = vdwg.mxu0
  %v256 = vsel %vm105, %v247, 0
  %v259 = vsel %vm105, %v252, 0
  %261 = vmatprep.subr.mxu0 0.0
  %262 = vmatpush1.msra.mxu0 0.0
  %263 = vmatprep.subr.mxu0 0.0
  %264 = vmatpush1.msra.mxu0 0.0
  %265 = vmatprep.subr.mxu0 0.0
  %266 = vmatpush1.msra.mxu0 0.0
  %267 = vmatprep.subr.mxu0 0.0
  %268 = vmatpush1.msra.mxu0 0.0
  %269 = vmatprep.subr.mxu0 0.0
  %270 = vmatpush1.msra.mxu0 0.0
  %271 = vmatprep.subr.mxu0 0.0
  %272 = vmatpush1.msra.mxu0 0.0
  %273 = vmatprep.subr.mxu0 0.0
  %274 = vmatpush1.msra.mxu0 0.0
  %275 = vmatprep.subr.mxu0 0.0
  %276 = vmatpush1.msra.mxu0 0.0
  %277 = vmatprep.subr.mxu0 0.0
  %278 = vmatpush1.msra.mxu0 0.0
  %279 = vmatprep.subr.mxu0 0.0
  %280 = vmatpush1.msra.mxu0 0.0
  %281 = vmatprep.subr.mxu0 0.0
  %282 = vmatpush1.msra.mxu0 0.0
  %283 = vmatprep.subr.mxu0 0.0
  %284 = vmatpush1.msra.mxu0 0.0
  %285 = vmatprep.subr.mxu0 0.0
  %286 = vmatpush1.msra.mxu0 0.0
  %287 = vmatprep.subr.mxu0 0.0
  %288 = vmatpush1.msra.mxu0 0.0
  %289 = vmatprep.subr.mxu0 0.0
  %290 = vmatpush1.msra.mxu0 %v173
  %291 = vmatprep.subr.mxu0 0.0
  %292 = vmatpush1.msra.mxu0 %v172
  %293 = vmatprep.subr.mxu0 0.0
  %294 = vmatpush2.msra.mxu0 0.0
  %295 = vmatprep.subr.mxu0 0.0
  %296 = vmatpush2.msra.mxu0 0.0
  %297 = vmatprep.subr.mxu0 0.0
  %298 = vmatpush2.msra.mxu0 0.0
  %299 = vmatprep.subr.mxu0 0.0
  %300 = vmatpush2.msra.mxu0 0.0
  %301 = vmatprep.subr.mxu0 0.0
  %302 = vmatpush2.msra.mxu0 0.0
  %303 = vmatprep.subr.mxu0 0.0
  %304 = vmatpush2.msra.mxu0 0.0
  %305 = vmatprep.subr.mxu0 0.0
  %306 = vmatpush2.msra.mxu0 0.0
  %307 = vmatprep.subr.mxu0 0.0
  %308 = vmatpush2.msra.mxu0 0.0
  %309 = vmatprep.subr.mxu0 0.0
  %310 = vmatpush2.msra.mxu0 0.0
  %311 = vmatprep.subr.mxu0 0.0
  %312 = vmatpush2.msra.mxu0 0.0
  %313 = vmatprep.subr.mxu0 0.0
  %314 = vmatpush2.msra.mxu0 0.0
  %315 = vmatprep.subr.mxu0 0.0
  %316 = vmatpush2.msra.mxu0 0.0
  %317 = vmatprep.subr.mxu0 0.0
  %318 = vmatpush2.msra.mxu0 0.0
  %319 = vmatprep.subr.mxu0 0.0
  %320 = vmatpush2.msra.mxu0 0.0
  %321 = vmatprep.subr.mxu0 0.0
  %322 = vmatpush2.msra.mxu0 0.0
  %323 = vmatprep.subr.mxu0 0.0
  %324 = vmatpush2.msra.mxu0 0.0
  %325 = vmatprep.mubr.f32.mxu0 0.0
  %326 = vmatmul.mubr.f32.gmra.mxu0 %v256
  %v327 = vpop.f32.mrf.mxu0
  %v328 = vadd.f32 0.0, %v327
  %v329 = vpop.f32.mrf.mxu0
  %330 = vmatprep.mubr.f32.mxu0 0.0
  %331 = vmatmul.mubr.f32.gmra.mxu0 %v259
  %v332 = vpop.f32.mrf.mxu0
  %v333 = vadd.f32 0.0, %v332
  %v334 = vpop.f32.mrf.mxu0
  %335 = vdwg.mxu0
  %v336 = vld [vmem:[#allocation3] sm:$0xff]
  %v337 = vld [vmem:[#allocation3 + $0x8] sm:$0x1f]
  %v339 = vsel %vm105, %v336, 0
  %v342 = vsel %vm105, %v337, 0
  %344 = vmatprep.subr.mxu0 0.0
  %345 = vmatpush1.msra.mxu0 0.0
  %346 = vmatprep.subr.mxu0 0.0
  %347 = vmatpush1.msra.mxu0 0.0
  %348 = vmatprep.subr.mxu0 0.0
  %349 = vmatpush1.msra.mxu0 0.0
  %350 = vmatprep.subr.mxu0 0.0
  %351 = vmatpush1.msra.mxu0 0.0
  %352 = vmatprep.subr.mxu0 0.0
  %353 = vmatpush1.msra.mxu0 0.0
  %354 = vmatprep.subr.mxu0 0.0
  %355 = vmatpush1.msra.mxu0 0.0
  %356 = vmatprep.subr.mxu0 0.0
  %357 = vmatpush1.msra.mxu0 0.0
  %358 = vmatprep.subr.mxu0 0.0
  %359 = vmatpush1.msra.mxu0 0.0
  %360 = vmatprep.subr.mxu0 0.0
  %361 = vmatpush1.msra.mxu0 0.0
  %362 = vmatprep.subr.mxu0 0.0
  %363 = vmatpush1.msra.mxu0 0.0
  %364 = vmatprep.subr.mxu0 0.0
  %365 = vmatpush1.msra.mxu0 0.0
  %366 = vmatprep.subr.mxu0 0.0
  %367 = vmatpush1.msra.mxu0 0.0
  %368 = vmatprep.subr.mxu0 0.0
  %369 = vmatpush1.msra.mxu0 0.0
  %370 = vmatprep.subr.mxu0 0.0
  %371 = vmatpush1.msra.mxu0 0.0
  %372 = vmatprep.subr.mxu0 0.0
  %373 = vmatpush1.msra.mxu0 %v333
  %374 = vmatprep.subr.mxu0 0.0
  %375 = vmatpush1.msra.mxu0 %v328
  %376 = vmatprep.subr.mxu0 0.0
  %377 = vmatpush2.msra.mxu0 0.0
  %378 = vmatprep.subr.mxu0 0.0
  %379 = vmatpush2.msra.mxu0 0.0
  %380 = vmatprep.subr.mxu0 0.0
  %381 = vmatpush2.msra.mxu0 0.0
  %382 = vmatprep.subr.mxu0 0.0
  %383 = vmatpush2.msra.mxu0 0.0
  %384 = vmatprep.subr.mxu0 0.0
  %385 = vmatpush2.msra.mxu0 0.0
  %386 = vmatprep.subr.mxu0 0.0
  %387 = vmatpush2.msra.mxu0 0.0
  %388 = vmatprep.subr.mxu0 0.0
  %389 = vmatpush2.msra.mxu0 0.0
  %390 = vmatprep.subr.mxu0 0.0
  %391 = vmatpush2.msra.mxu0 0.0
  %392 = vmatprep.subr.mxu0 0.0
  %393 = vmatpush2.msra.mxu0 0.0
  %394 = vmatprep.subr.mxu0 0.0
  %395 = vmatpush2.msra.mxu0 0.0
  %396 = vmatprep.subr.mxu0 0.0
  %397 = vmatpush2.msra.mxu0 0.0
  %398 = vmatprep.subr.mxu0 0.0
  %399 = vmatpush2.msra.mxu0 0.0
  %400 = vmatprep.subr.mxu0 0.0
  %401 = vmatpush2.msra.mxu0 0.0
  %402 = vmatprep.subr.mxu0 0.0
  %403 = vmatpush2.msra.mxu0 0.0
  %404 = vmatprep.subr.mxu0 0.0
  %405 = vmatpush2.msra.mxu0 0.0
  %406 = vmatprep.subr.mxu0 0.0
  %407 = vmatpush2.msra.mxu0 0.0
  %408 = vmatprep.mubr.f32.mxu0 0.0
  %409 = vmatmul.mubr.f32.gmra.mxu0 %v339
  %v410 = vpop.f32.mrf.mxu0
  %v411 = vadd.f32 0.0, %v410
  %v412 = vpop.f32.mrf.mxu0
  %413 = vmatprep.mubr.f32.mxu0 0.0
  %414 = vmatmul.mubr.f32.gmra.mxu0 %v342
  %v415 = vpop.f32.mrf.mxu0
  %v416 = vadd.f32 0.0, %v415
  %v417 = vpop.f32.mrf.mxu0
  %418 = vdwg.mxu0
  %419 = vst.msk [vmem:[%s4] sm:$0xff] %vm141, %v411
  %420 = vst.msk [vmem:[%s4 + $0x8] sm:$0x1f] %vm143, %v416
  %v421 = vld [vmem:[%s0] sm:$0xff]
  %v422 = vld [vmem:[%s0 + $0x8] sm:$0xff]
  %vm423 = vcmask 64515
  %424 = vst.msk [vmem:[%s5 - $0x3] sm:$0xf8] %vm423, %v421
  %425 = vst.msk [vmem:[%s5 + $0x5] sm:$0xff] %vm141, %v422
  %428 = vrot.lane.b32.xlu0 %v411, 120
  %v429 = vpop.permute.xlu0 %428
  %430 = vrot.lane.b32.xlu0 %v416, 120
  %v431 = vpop.permute.xlu0 %430
  %s434 = scalar_lea.vmem %s4, 16
  %435 = vst.msk [vmem:[%s434] sm:$0xff] %vm141, %v429
  %436 = vst.msk [vmem:[%s434 + $0x8] sm:$0x1f] %vm143, %v431
  %v437 = vld [vmem:[%s157] sm:$0xff]
  %v438 = vld [vmem:[%s157 + $0x8] sm:$0xff]
  %s439 = scalar_lea.vmem %s5, 16
  %440 = vst.msk [vmem:[%s439 - $0x3] sm:$0xf8] %vm423, %v437
  %441 = vst.msk [vmem:[%s439 + $0x5] sm:$0xff] %vm141, %v438
  // Predicated region
  $region18: #{tpu_custom_call.1} parent=0 // pred_check
    _
  $region19: #{tpu_custom_call.1} parent=0 // pred_check_branch
    %443 = sbr.rel (0) target = $region21
  $region20: #{tpu_custom_call.1} parent=0 // pred_region
    _
  $region21: #{tpu_custom_call.1} parent=0 // pred_fallthru
    _
  // Predicated region
  $region22: #{tpu_custom_call.1} parent=0 // pred_check
    _
  $region23: #{tpu_custom_call.1} parent=0 // pred_check_branch
    %445 = sbr.rel (0) target = $region25
  $region24: #{tpu_custom_call.1} parent=0 // pred_region
    _
  $region25: #{tpu_custom_call.1} parent=0 // pred_fallthru
    _
  // Predicated region
  $region26: #{tpu_custom_call.1} parent=0 // pred_check
    _
  $region27: #{tpu_custom_call.1} parent=0 // pred_check_branch
    %447 = sbr.rel (0) target = $region29
  $region28: #{tpu_custom_call.1} parent=0 // pred_region
    _
  $region29: #{tpu_custom_call.1} parent=0 // pred_fallthru
    _
  // Predicated region
  $region30: #{tpu_custom_call.1} parent=0 // pred_check
    _
  $region31: #{tpu_custom_call.1} parent=0 // pred_check_branch
    %449 = sbr.rel (0) target = $region33
  $region32: #{tpu_custom_call.1} parent=0 // pred_region
    _
  $region33: #{tpu_custom_call.1} parent=0 // pred_fallthru
    _

</llo_original>
